<compile_context>
chip_gen: v6e
topology: v6e:2x2x1
jax: 0.10.0
libtpu: 0.0.40
codegen_flags: <defaults>
</compile_context>

<pallas_src>
import jax
import jax.numpy as jnp
from jax.experimental import pallas as pl
from jax.experimental.pallas import tpu as pltpu


_LANE = 128
# Per-grid-step HBM traffic target (input block + output block, single copy).
# 8 MiB => multi-microsecond DMA per step vs ~0.35 us fixed step overhead,
# and the double-buffered pipeline footprint stays ~16 MiB + slack: safely
# inside v7x's 64 MiB physical / 32 MiB default-scoped VMEM as well as
# v5e/v6e.  Derived from a byte budget, not a hardcoded lane count, so it is
# generation-agnostic.
_TARGET_STEP_BYTES = 8 * 1024 * 1024
# Batch elements folded into one grid step are unrolled as independent small
# (Cout,Cin)@(Cin,T) matmuls inside the kernel; keep the static unroll short.
_MAX_BATCH_BLOCK = 8


# ----------------------------- Pallas kernel -----------------------------

def _pointwise_conv_kernel(w_ref, b_ref, x_ref, o_ref):
    """y[nb, co, t] = sum_ci W[co, ci] * x[nb, ci, t] + b[co].

    w_ref: (Cout, Cin)   VMEM, grid-invariant (resident, not re-streamed)
    b_ref: (Cout, 1)     VMEM, grid-invariant, broadcasts along lanes
    x_ref: (NB, Cin, T)  spatial tile T on the lane axis
    o_ref: (NB, Cout, T) lane-dense output -> full dense block stores
    """
    w = w_ref[...]
    b = b_ref[...]
    # NB is small (<= _MAX_BATCH_BLOCK): static unroll keeps every store a
    # full dense (Cout, T) sub-block write.
    #
    # Note on the dot: with Cin/Cout ~ 4-8 the MXU is heavily padded, but its
    # push/pop traffic per 128-lane chunk stays under the per-chunk HBM DMA
    # time, so it remains hidden filler.  Only if a v5e bundle dump showed the
    # MXU push slot binding would we swap to a VPU broadcast-multiply-add with
    # scalar weights (per the perf review); kept on the MXU path here for
    # robust lowering.
    for i in range(x_ref.shape[0]):
        acc = jnp.dot(w, x_ref[i], preferred_element_type=jnp.float32)
        o_ref[i] = (acc + b).astype(o_ref.dtype)


# --------------------------- tiling heuristics ----------------------------

def _round_up(v, m):
    return -(-v // m) * m


def _choose_spatial_tile(hw, bytes_per_col):
    """Pick (tile, hw_padded): spatial lane tile and (maybe padded) extent.

    tile is a multiple of 128 (lane-dense, unmasked stores) unless it equals
    the full spatial extent.  Sized from the VMEM byte budget so per-step DMA
    is MiB-scale on every TPU generation.
    """
    want = max(_LANE, (_TARGET_STEP_BYTES // bytes_per_col) // _LANE * _LANE)
    if hw <= want:
        # Whole spatial extent fits the per-step budget -> one full-extent
        # spatial block (always a legal block shape); batch blocking in the
        # caller builds the step up to MiB scale.
        return hw, hw
    # Spatial tiling needed.  Prefer an exact multiple-of-128 divisor of hw:
    # no padding => no extra HBM pass over x.
    if hw % _LANE == 0:
        t = min(want, hw)
        min_ok = max(_LANE, want // 16)   # accept steps down to ~1/16 of target
        while t >= min_ok:
            if hw % t == 0:
                return t, hw
            t -= _LANE
    # No acceptable divisor: pad hw to tile * num_steps (waste < 128 cols per
    # step; costs one extra copy of x in the wrapper, still far cheaper than a
    # single giant un-pipelined block, which would bust v7x's 64 MiB VMEM).
    num_steps = -(-hw // want)
    tile = _round_up(-(-hw // num_steps), _LANE)
    return tile, tile * num_steps


def _choose_batch_block(n, step_bytes_per_batch):
    """Largest divisor of n (<= _MAX_BATCH_BLOCK) fitting the step budget,
    while keeping >= 2 grid steps so both v7x TensorCores stay busy."""
    if n <= 1:
        return 1
    cap = max(1, _TARGET_STEP_BYTES // max(1, step_bytes_per_batch))
    cap = min(cap, _MAX_BATCH_BLOCK, max(1, n // 2))
    for d in range(int(cap), 0, -1):
        if n % d == 0:
            return d
    return 1


# ------------------------------- wrapper ----------------------------------

def pointwise_conv_nchw(x, w, b):
    """1x1 Conv2d forward, NCHW in / NCHW out.

    x: (N, Cin, H, W), w: (Cout, Cin), b: (Cout,).
    """
    n, cin, h, wd = x.shape
    cout = w.shape[0]
    hw = h * wd
    itemsize = x.dtype.itemsize
    bytes_per_col = (cin + cout) * itemsize   # in+out bytes per batch elem per column

    # Zero-cost view: channels on sublanes, contiguous spatial on lanes.
    x3 = x.reshape(n, cin, hw)

    tile, hw_p = _choose_spatial_tile(hw, bytes_per_col)
    if hw_p != hw:
        # Rare path (large image, awkward H*W): small pad keeps tiles lane-dense
        # and dividing, instead of one giant un-pipelined block per batch elem.
        x3 = jnp.pad(x3, ((0, 0), (0, 0), (0, hw_p - hw)))
    spatial_steps = hw_p // tile

    # Small feature maps: a (1, Cin, HW) block is only KiB-scale and the
    # per-step overhead would dominate -> fold several batch elements
    # (contiguous in NCHW => one large DMA) into each grid step.
    if spatial_steps == 1:
        nb = _choose_batch_block(n, bytes_per_col * hw_p)
    else:
        nb = 1

    grid = (n // nb, spatial_steps)
    b2 = b.reshape(cout, 1)

    # Explicit scoped-VMEM budget: double-buffered input + output blocks plus
    # slack for the f32 accumulator / internal scratch.  By construction
    # 2*(in+out) <= 16 MiB, so this stays <= ~28 MiB on every generation
    # (under v7x's 32 MiB default scoped limit and 64 MiB physical VMEM).
    in_block_bytes = nb * cin * tile * itemsize
    out_block_bytes = nb * cout * tile * itemsize
    vmem_limit = int(2 * (in_block_bytes + out_block_bytes) + (12 << 20))

    y3 = pl.pallas_call(
        _pointwise_conv_kernel,
        out_shape=jax.ShapeDtypeStruct((n, cout, hw_p), x.dtype),
        grid_spec=pltpu.PrefetchScalarGridSpec(
            num_scalar_prefetch=0,
            grid=grid,
            in_specs=[
                # Tiny grid-invariant operands: resident whole in VMEM,
                # not part of the streamed/double-buffered block pipeline.
                pl.BlockSpec(memory_space=pltpu.MemorySpace.VMEM),  # W (Cout, Cin)
                pl.BlockSpec(memory_space=pltpu.MemorySpace.VMEM),  # b (Cout, 1)
                # Streamed input: batch blocked, channels full, spatial tiled.
                pl.BlockSpec((nb, cin, tile), lambda i, s: (i, 0, s)),
            ],
            out_specs=pl.BlockSpec((nb, cout, tile), lambda i, s: (i, 0, s)),
        ),
        compiler_params=pltpu.CompilerParams(
            dimension_semantics=("parallel", "parallel"),
            vmem_limit_bytes=vmem_limit,
        ),
    )(w, b2, x3)

    if hw_p != hw:
        y3 = y3[:, :, :hw]
    return y3.reshape(n, cout, h, wd)


# -------------------------- Module-like wrapper ---------------------------

class ZeroConvOut:
    """JAX/Pallas port of SfPUEL ZeroConvOut (1x1 convs, list or single).

    Note: despite the name, the PyTorch reference uses the *default*
    nn.Conv2d init (not zero init), so we match that: uniform(+-1/sqrt(fan_in))
    for both weight and bias (fan_in = Cin for a 1x1 kernel).
    """

    def __init__(self, in_channels, out_channel=None, *, key):
        self.params = []  # list of (weight (Cout, Cin), bias (Cout,))
        if isinstance(in_channels, (list, tuple)):
            chans = [(c, c) for c in in_channels]
        elif isinstance(in_channels, int):
            if out_channel is None:
                out_channel = in_channels
            chans = [(in_channels, out_channel)]
        else:
            raise Exception(f"Unexpected type {type(in_channels)}")

        for (cin, cout) in chans:
            key, kw, kb = jax.random.split(key, 3)
            bound = 1.0 / (cin ** 0.5)  # nn.Conv2d default range (1x1 kernel)
            w = jax.random.uniform(kw, (cout, cin), jnp.float32,
                                   minval=-bound, maxval=bound)
            b = jax.random.uniform(kb, (cout,), jnp.float32,
                                   minval=-bound, maxval=bound)
            self.params.append((w, b))

    def __call__(self, x):
        if isinstance(x, (list, tuple)):
            feats = []
            for idx, (w, b) in enumerate(self.params):
                feats.append(pointwise_conv_nchw(x[idx], w, b))
            return feats
        else:
            w, b = self.params[0]
            return pointwise_conv_nchw(x, w, b)


# --------------------------------- main -----------------------------------

if __name__ == "__main__":
    key = jax.random.PRNGKey(0)
    k_in, k_in2, k_in3, k_in4, k_mod, k_mod2 = jax.random.split(key, 6)

    # 1) Single-tensor path: small feature map (full-spatial-extent block).
    N, C, H, W = 2, 4, 16, 16
    x = jax.random.normal(k_in, (N, C, H, W), jnp.float32)
    module = ZeroConvOut(C, key=k_mod)
    y = jax.block_until_ready(module(x))
    assert y.shape == (N, C, H, W), y.shape
    w0, b0 = module.params[0]
    y_ref = jnp.einsum("nchw,oc->nohw", x, w0) + b0[None, :, None, None]
    assert jnp.allclose(y, y_ref, atol=1e-5, rtol=1e-5)

    # 2) List path: ZeroConvOut([4, 8]) on a list of tensors (8x8 exercises the
    #    full-extent, non-128-lane tile).
    C2, H2, W2 = 8, 8, 8
    x2 = jax.random.normal(k_in2, (N, C2, H2, W2), jnp.float32)
    module_list = ZeroConvOut([C, C2], key=k_mod2)
    feats = jax.block_until_ready(module_list([x, x2]))
    assert feats[0].shape == (N, C, H, W) and feats[1].shape == (N, C2, H2, W2)
    for xi, yi, (wi, bi) in zip([x, x2], feats, module_list.params):
        yr = jnp.einsum("nchw,oc->nohw", xi, wi) + bi[None, :, None, None]
        assert jnp.allclose(yi, yr, atol=1e-5, rtol=1e-5)

    # 3) Larger batch of small maps: exercises the batch-blocked path
    #    (NB > 1 batch elements folded into one grid step).
    x4 = jax.random.normal(k_in4, (8, C, H, W), jnp.float32)
    y4 = jax.block_until_ready(pointwise_conv_nchw(x4, w0, b0))
    y4_ref = jnp.einsum("nchw,oc->nohw", x4, w0) + b0[None, :, None, None]
    assert y4.shape == (8, C, H, W)
    assert jnp.allclose(y4, y4_ref, atol=1e-5, rtol=1e-5)

    # 4) Larger feature map: exercises the MiB-scale spatial-tiling path
    #    (grid = (N, HW//tile), lane-dense 128-multiple tiles).
    H3, W3 = 768, 512
    x3 = jax.random.normal(k_in3, (N, C, H3, W3), jnp.float32)
    y3 = jax.block_until_ready(pointwise_conv_nchw(x3, w0, b0))
    y3_ref = (jnp.einsum("nchw,oc->nohw", x3, w0, precision="highest")
              + b0[None, :, None, None])
    assert y3.shape == (N, C, H3, W3)
    assert jnp.allclose(y3, y3_ref, atol=1e-4, rtol=1e-4)

    print("KERNEL_OK")
</pallas_src>

<mosaic_0001>
module attributes {stable_mosaic.version = 11 : i64} {
  func.func @_pointwise_conv_kernel(%arg0: i32, %arg1: i32, %arg2: memref<4x4xf32, #tpu.memory_space<vmem>>, %arg3: memref<4x1xf32, #tpu.memory_space<vmem>>, %arg4: memref<1x4x256xf32, #tpu.memory_space<vmem>>, %arg5: memref<1x4x256xf32, #tpu.memory_space<vmem>>) attributes {dimension_semantics = [#tpu.dimension_semantics<parallel>, #tpu.dimension_semantics<parallel>], iteration_bounds = array<i64: 2, 1>, scalar_prefetch = 0 : i64, scratch_operands = 0 : i64, tpu.core_type = #tpu.core_type<tc>, window_params = [{pipeline_mode = #tpu.pipeline_mode<synchronous>, transform_indices = @transform_0, window_bounds = array<i64: 4, 4>}, {pipeline_mode = #tpu.pipeline_mode<synchronous>, transform_indices = @transform_1, window_bounds = array<i64: 4, 1>}, {transform_indices = @transform_2, window_bounds = array<i64: 1, 4, 256>}, {transform_indices = @transform_3, window_bounds = array<i64: 1, 4, 256>}]} {
    %c0 = arith.constant 0 : index
    %c0_0 = arith.constant 0 : index
    %0 = vector.load %arg2[%c0, %c0_0] : memref<4x4xf32, #tpu.memory_space<vmem>>, vector<4x4xf32>
    %c0_1 = arith.constant 0 : index
    %c0_2 = arith.constant 0 : index
    %1 = vector.load %arg3[%c0_1, %c0_2] : memref<4x1xf32, #tpu.memory_space<vmem>>, vector<4x1xf32>
    %c0_3 = arith.constant 0 : index
    %c0_4 = arith.constant 0 : index
    %c0_5 = arith.constant 0 : index
    %2 = vector.load %arg4[%c0_3, %c0_4, %c0_5] : memref<1x4x256xf32, #tpu.memory_space<vmem>>, vector<1x4x256xf32>
    %3 = vector.shape_cast %2 : vector<1x4x256xf32> to vector<4x256xf32>
    %cst = arith.constant dense<0.000000e+00> : vector<4x256xf32>
    %4 = tpu.matmul %0, %3, %cst {dimension_numbers = #tpu.dot_dimension_numbers<[1], [0], [0], [1], [0, 0, 1, 1], [], []>} : vector<4x4xf32>, vector<4x256xf32>, vector<4x256xf32> -> vector<4x256xf32>
    %5 = vector.broadcast %1 : vector<4x1xf32> to vector<4x256xf32>
    %6 = arith.addf %4, %5 : vector<4x256xf32>
    %c0_6 = arith.constant 0 : index
    %c0_7 = arith.constant 0 : index
    %c0_8 = arith.constant 0 : index
    %7 = vector.load %arg5[%c0_6, %c0_7, %c0_8] : memref<1x4x256xf32, #tpu.memory_space<vmem>>, vector<1x4x256xf32>
    %8 = vector.shape_cast %7 : vector<1x4x256xf32> to vector<4x256xf32>
    %9 = vector.shape_cast %6 : vector<4x256xf32> to vector<1x4x256xf32>
    tpu.vector_store %arg5[%c0_6, %c0_7, %c0_8], %9 {strides = array<i32>} : memref<1x4x256xf32, #tpu.memory_space<vmem>>, vector<1x4x256xf32>,
    return
  }
  func.func @transform_0(%arg0: i32, %arg1: i32) -> (i32, i32) {
    %c0_i32 = arith.constant 0 : i32
    %c0_i32_0 = arith.constant 0 : i32
    %c0_i32_1 = arith.constant 0 : i32
    return %c0_i32, %c0_i32_0 : i32, i32
  }
  func.func @transform_1(%arg0: i32, %arg1: i32) -> (i32, i32) {
    %c0_i32 = arith.constant 0 : i32
    %c0_i32_0 = arith.constant 0 : i32
    %c0_i32_1 = arith.constant 0 : i32
    return %c0_i32, %c0_i32_0 : i32, i32
  }
  func.func @transform_2(%arg0: i32, %arg1: i32) -> (i32, i32, i32) {
    %c0_i32 = arith.constant 0 : i32
    %c0_i32_0 = arith.constant 0 : i32
    return %arg0, %c0_i32, %arg1 : i32, i32, i32
  }
  func.func @transform_3(%arg0: i32, %arg1: i32) -> (i32, i32, i32) {
    %c0_i32 = arith.constant 0 : i32
    %c0_i32_0 = arith.constant 0 : i32
    return %arg0, %c0_i32, %arg1 : i32, i32, i32
  }
}

</mosaic_0001>

<llo_original>
// kernel: tpu_custom_call.1
$region0: #{tpu_custom_call.1}
  #allocation0 [shape = 'u32[]', space=smem, size = 0x4, offset = 0x4, fixed_abs, tag = 'smem constant byte address 0x4 - core index']
  #allocation1 [shape = 'u32[144,128]{1,0:T(1,128)}', space=vmem, size = 0x12000, scoped, tag = 'internal scratch']
  %s0 = inlined_call_operand.vmem [shape: f32[4,4], index: 0, kind: input, shape index: {}]
  %s1 = inlined_call_operand.vmem [shape: f32[4,1], index: 1, kind: input, shape index: {}]
  %s2 = inlined_call_operand.hbm [shape: f32[2,4,256], index: 2, kind: input, shape index: {}]
  %s3 = inlined_call_operand.hbm [shape: f32[2,4,256], index: 3, kind: output, shape index: {}]
  %s4 = sld [smem:[#allocation0]]
  $region49: #{tpu_custom_call.1} parent=0
    _
  %s6 = ssub.s32 1, %s4
  %s7 = scalar_select 0, %s6, %s4
  $region1: #{tpu_custom_call.1} parent=0
    #allocation2 [shape = 'u8[8192]{0}', space=vmem, size = 0x2000, scoped, tag = 'input window, operand 2']
    #allocation3 [shape = 's32[2]{0}', space=sflag, size = 0x8, scoped, tag = 'scoped memory for tpu_custom_call.1']
    #allocation4 [shape = 's32[2]{0}', space=sflag, size = 0x8, scoped, tag = 'scoped memory for tpu_custom_call.1']
    #allocation5 [shape = 'u8[8192]{0}', space=vmem, size = 0x2000, scoped, tag = 'output window, operand 0']
    %8 = vsyncpa [#allocation3], 0
    %s9 = scalar_lea.sflag [#allocation3], 1
    %10 = vsyncpa %s9, 0
    %11 = vsyncpa [#allocation4], 0
    %s12 = scalar_lea.sflag [#allocation4], 1
    %13 = vsyncpa %s12, 0
    loop: start=0, step=1, limit=4
    $region2: #{tpu_custom_call.1} parent=1 // loop_pre_header
      _
    $region3: #{tpu_custom_call.1} parent=1 // loop_header
      %s15 = sphi 0, %s19
      %p16 = scmp.ge.s32.totalorder %s15, 4
      %s22 = sphi 0, %s34
      %s23 = sphi 0, %s30
      %s24 = sphi 0, %s22
      %s25 = sphi 0, %s23
      %s26 = sphi 0, %s24
      %s27 = sphi 0, %s25
      %s35 = sphi 0, %s35
      %s37 = sphi 0, %s35
      %s38 = sphi 0, %s37
      %s52 = sphi 0, %s38
      %s56 = sphi 0, %s56
      %s58 = sphi 0, %s56
      %s59 = sphi 0, %s58
      %s73 = sphi 0, %s59
      %s81 = sphi 0, %s83
      %s84 = sphi 0, %s81
      %s85 = sphi 0, %s84
      %s101 = sphi 0, %s85
      %s109 = sphi 0, %s111
      %s112 = sphi 0, %s109
      %s113 = sphi 0, %s112
      %s129 = sphi 0, %s113
    $region4: #{tpu_custom_call.1} parent=1 // loop_header_branch
      %18 = sbr.rel (%p16) target = $region8
    $region5: #{tpu_custom_call.1} parent=1 // loop_body
      %s20 = ssub.s32 %s15, 1
      %s21 = ssub.s32 %s15, 2
      %s28 = sadd.s32 1, %s23
      %p29 = scmp.ge.s32.totalorder %s28, 1
      %s30 = scalar_select %p29, 0, %s28
      %s31 = sadd.s32 1, %s22
      %s32 = scalar_select %p29, %s31, %s22
      %p33 = scmp.ge.s32.totalorder %s32, 2
      %s34 = scalar_select %p33, 0, %s32
      %s36 = sadd.s32 %s35, 1
      %p39 = scmp.eq.s32.totalorder %s15, 1
      %p40 = scmp.ne.s32.totalorder %s35, %s37
      %p41 = scmp.eq.s32.totalorder %s15, 0
      %p42 = por %p40, %p41
      %p43 = scmp.ne.s32.totalorder %s35, %s37
      %p44 = scmp.eq.s32.totalorder %s20, 1
      %p45 = por %p43, %p44
      %p46 = scmp.ne.s32.totalorder %s37, %s38
      %p47 = scmp.eq.s32.totalorder %s20, 0
      %p48 = por %p46, %p47
      %p49 = scmp.ne.s32.totalorder %s37, %s38
      %p50 = scmp.eq.s32.totalorder %s21, 1
      %p51 = por %p49, %p50
      %p53 = scmp.ne.s32.totalorder %s38, %s52
      %p54 = scmp.eq.s32.totalorder %s21, 0
      %p55 = por %p53, %p54
      %s57 = sadd.s32 %s56, 1
      %p60 = scmp.eq.s32.totalorder %s15, 1
      %p61 = scmp.ne.s32.totalorder %s56, %s58
      %p62 = scmp.eq.s32.totalorder %s15, 0
      %p63 = por %p61, %p62
      %p64 = scmp.ne.s32.totalorder %s56, %s58
      %p65 = scmp.eq.s32.totalorder %s20, 1
      %p66 = por %p64, %p65
      %p67 = scmp.ne.s32.totalorder %s58, %s59
      %p68 = scmp.eq.s32.totalorder %s20, 0
      %p69 = por %p67, %p68
      %p70 = scmp.ne.s32.totalorder %s58, %s59
      %p71 = scmp.eq.s32.totalorder %s21, 1
      %p72 = por %p70, %p71
      %p74 = scmp.ne.s32.totalorder %s59, %s73
      %p75 = scmp.eq.s32.totalorder %s21, 0
      %p76 = por %p74, %p75
      %s77 = ssub.s32 %s22, %s34
      %s78 = ssub.s32 %s23, %s30
      %s79 = sor.u32 %s77, %s78
      %p80 = scmp.eq.s32.totalorder %s79, 0
      %s82 = sadd.s32 %s81, 1
      %s83 = scalar_select %p80, %s81, %s82
      %p86 = pneg %p80
      %p87 = scmp.eq.s32.totalorder %s15, 1
      %p88 = por %p86, %p87
      %p89 = scmp.ne.s32.totalorder %s81, %s84
      %p90 = scmp.eq.s32.totalorder %s15, 0
      %p91 = por %p89, %p90
      %p92 = scmp.ne.s32.totalorder %s81, %s84
      %p93 = scmp.eq.s32.totalorder %s20, 1
      %p94 = por %p92, %p93
      %p95 = scmp.ne.s32.totalorder %s84, %s85
      %p96 = scmp.eq.s32.totalorder %s20, 0
      %p97 = por %p95, %p96
      %p98 = scmp.ne.s32.totalorder %s84, %s85
      %p99 = scmp.eq.s32.totalorder %s21, 1
      %p100 = por %p98, %p99
      %p102 = scmp.ne.s32.totalorder %s85, %s101
      %p103 = scmp.eq.s32.totalorder %s21, 0
      %p104 = por %p102, %p103
      %s105 = ssub.s32 %s22, %s34
      %s106 = ssub.s32 %s23, %s30
      %s107 = sor.u32 %s105, %s106
      %p108 = scmp.eq.s32.totalorder %s107, 0
      %s110 = sadd.s32 %s109, 1
      %s111 = scalar_select %p108, %s109, %s110
      %p114 = pneg %p108
      %p115 = scmp.eq.s32.totalorder %s15, 1
      %p116 = por %p114, %p115
      %p117 = scmp.ne.s32.totalorder %s109, %s112
      %p118 = scmp.eq.s32.totalorder %s15, 0
      %p119 = por %p117, %p118
      %p120 = scmp.ne.s32.totalorder %s109, %s112
      %p121 = scmp.eq.s32.totalorder %s20, 1
      %p122 = por %p120, %p121
      %p123 = scmp.ne.s32.totalorder %s112, %s113
      %p124 = scmp.eq.s32.totalorder %s20, 0
      %p125 = por %p123, %p124
      %p126 = scmp.ne.s32.totalorder %s112, %s113
      %p127 = scmp.eq.s32.totalorder %s21, 1
      %p128 = por %p126, %p127
      %p130 = scmp.ne.s32.totalorder %s113, %s129
      %p131 = scmp.eq.s32.totalorder %s21, 0
      %p132 = por %p130, %p131
      %p133 = scmp.le.s32.totalorder 1, %s15
      %p134 = scmp.lt.s32.totalorder %s15, 3
      %p135 = pnand %p133, %p134
      %p136 = pneg %p135
      // Predicated region
      $region9: #{tpu_custom_call.1} parent=5 // pred_check
        _
      $region10: #{tpu_custom_call.1} parent=5 // pred_check_branch
        %138 = sbr.rel (%p135) target = $region12
      $region11: #{tpu_custom_call.1} parent=5 // pred_region
        %s139 = ssub.s32 %s15, 1
        // Predicated region
        $region13: #{tpu_custom_call.1} parent=11 // pred_check
          %p140 = pneg %p48
        $region14: #{tpu_custom_call.1} parent=11 // pred_check_branch
          %142 = sbr.rel (%p140) target = $region16
        $region15: #{tpu_custom_call.1} parent=11 // pred_region
          _
        $region16: #{tpu_custom_call.1} parent=11 // pred_fallthru
          _
        // Predicated region
        $region17: #{tpu_custom_call.1} parent=11 // pred_check
          %p143 = pneg %p69
        $region18: #{tpu_custom_call.1} parent=11 // pred_check_branch
          %145 = sbr.rel (%p143) target = $region20
        $region19: #{tpu_custom_call.1} parent=11 // pred_region
          _
        $region20: #{tpu_custom_call.1} parent=11 // pred_fallthru
          _
      $region12: #{tpu_custom_call.1} parent=5 // pred_fallthru
        _
      %p146 = scmp.lt.s32.totalorder %s15, 2
      // Predicated region
      $region21: #{tpu_custom_call.1} parent=5 // pred_check
        %p147 = pneg %p146
      $region22: #{tpu_custom_call.1} parent=5 // pred_check_branch
        %149 = sbr.rel (%p147) target = $region24
      $region23: #{tpu_custom_call.1} parent=5 // pred_region
        // Predicated region
        $region25: #{tpu_custom_call.1} parent=23 // pred_check
          %p150 = pneg %p91
        $region26: #{tpu_custom_call.1} parent=23 // pred_check_branch
          %152 = sbr.rel (%p150) target = $region28
        $region27: #{tpu_custom_call.1} parent=23 // pred_region
          %s153 = sand.u32 %s81, 1
          %s154 = scalar_lea.sflag [#allocation3], %s153
          %s155 = sand.u32 %s81, 1
          %s156 = smul.addr %s155, 8
          %s157 = scalar_lea.vmem [#allocation2], %s156
          %s158 = smul.u32 2, %s23
          %s160 = ssub.s32 128, 128
          %161 = vsyncadd %s154, %s160
          %s162 = smul.addr %s22, 2
          %s163 = sadd.s32 %s158, %s162
          %s164 = smul.addr %s163, 64
          %s165 = scalar_lea.hbm %s2, %s164
          %s167 = sshll.u32 %s157, 4
          %s168 = int_to_ptr.vmem [resolvable:$true] %s167
          %170 = dma.hbm_to_vmem [thread:$0]  %s165, 128, %s168, %s154
        $region28: #{tpu_custom_call.1} parent=23 // pred_fallthru
          _
      $region24: #{tpu_custom_call.1} parent=5 // pred_fallthru
        _
      %p171 = scmp.le.s32.totalorder 1, %s15
      %p172 = scmp.lt.s32.totalorder %s15, 3
      %p173 = pnand %p171, %p172
      %p174 = pneg %p173
      // Predicated region
      $region29: #{tpu_custom_call.1} parent=5 // pred_check
        _
      $region30: #{tpu_custom_call.1} parent=5 // pred_check_branch
        %176 = sbr.rel (%p173) target = $region32
      $region31: #{tpu_custom_call.1} parent=5 // pred_region
        %s177 = ssub.s32 %s15, 1
        %s178 = sand.u32 %s84, 1
        %s179 = scalar_lea.sflag [#allocation3], %s178
        %s180 = sand.u32 %s84, 1
        %s181 = smul.addr %s180, 8
        %s182 = scalar_lea.vmem [#allocation2], %s181
        // Predicated region
        $region33: #{tpu_custom_call.1} parent=31 // pred_check
          %p183 = pneg %p97
        $region34: #{tpu_custom_call.1} parent=31 // pred_check_branch
          %185 = sbr.rel (%p183) target = $region36
        $region35: #{tpu_custom_call.1} parent=31 // pred_region
          %186 = dma.done %s179, 128
        $region36: #{tpu_custom_call.1} parent=31 // pred_fallthru
          _
        %p187 = pneg %p48
        %p188 = pneg %p45
        %p189 = pneg %p69
        %p190 = pneg %p66
        %s191 = sand.u32 %s84, 1
        %s192 = scalar_lea.sflag [#allocation3], %s191
        %s193 = sand.u32 %s84, 1
        %s194 = smul.addr %s193, 8
        %s195 = scalar_lea.vmem [#allocation2], %s194
        %p196 = pneg %p97
        %p197 = pneg %p94
        %p198 = pneg %p125
        %p199 = pneg %p122
        %s200 = sand.u32 %s112, 1
        %s201 = scalar_lea.sflag [#allocation4], %s200
        %s202 = sand.u32 %s112, 1
        %s203 = smul.addr %s202, 8
        %s204 = scalar_lea.vmem [#allocation5], %s203
        %s205 = smul.u32 2, %s25
        %s206 = smul.u32 2, %s25
        %v207 = vld [vmem:[%s0] sm:$0xf]
        %v208 = vld [vmem:[%s1] sm:$0xf]
        %v209 = vld [vmem:[%s182] sm:$0xff]
        %211 = vset.pattern.permute.xlu0 0
        %212 = vperm.xlu0 %211, %v208
        %v213 = vpop.permute.xlu0 %212
        %v216 = vcombine.high %v209, %v209
        %vm217 = vcmask 31744
        %v219 = vsel %vm217, %v207, 0
        %vm221 = vcmask 1043456
        %v222 = vsel %vm221, %v209, 0
        %v224 = vsel %vm221, %v216, 0
        %226 = vmatprep.subr.mxu0 0.0
        %227 = vmatpush1.msra.mxu0 0.0
        %228 = vmatprep.subr.mxu0 0.0
        %229 = vmatpush1.msra.mxu0 0.0
        %230 = vmatprep.subr.mxu0 0.0
        %231 = vmatpush1.msra.mxu0 0.0
        %232 = vmatprep.subr.mxu0 0.0
        %233 = vmatpush1.msra.mxu0 0.0
        %234 = vmatprep.subr.mxu0 0.0
        %235 = vmatpush1.msra.mxu0 0.0
        %236 = vmatprep.subr.mxu0 0.0
        %237 = vmatpush1.msra.mxu0 0.0
        %238 = vmatprep.subr.mxu0 0.0
        %239 = vmatpush1.msra.mxu0 0.0
        %240 = vmatprep.subr.mxu0 0.0
        %241 = vmatpush1.msra.mxu0 0.0
        %242 = vmatprep.subr.mxu0 0.0
        %243 = vmatpush1.msra.mxu0 0.0
        %244 = vmatprep.subr.mxu0 0.0
        %245 = vmatpush1.msra.mxu0 0.0
        %246 = vmatprep.subr.mxu0 0.0
        %247 = vmatpush1.msra.mxu0 0.0
        %248 = vmatprep.subr.mxu0 0.0
        %249 = vmatpush1.msra.mxu0 0.0
        %250 = vmatprep.subr.mxu0 0.0
        %251 = vmatpush1.msra.mxu0 0.0
        %252 = vmatprep.subr.mxu0 0.0
        %253 = vmatpush1.msra.mxu0 0.0
        %254 = vmatprep.subr.mxu0 0.0
        %255 = vmatpush1.msra.mxu0 0.0
        %256 = vmatprep.subr.mxu0 %v224
        %257 = vmatpush1.msra.mxu0 %v222
        %258 = vmatprep.subr.mxu0 0.0
        %259 = vmatpush2.msra.mxu0 0.0
        %260 = vmatprep.subr.mxu0 0.0
        %261 = vmatpush2.msra.mxu0 0.0
        %262 = vmatprep.subr.mxu0 0.0
        %263 = vmatpush2.msra.mxu0 0.0
        %264 = vmatprep.subr.mxu0 0.0
        %265 = vmatpush2.msra.mxu0 0.0
        %266 = vmatprep.subr.mxu0 0.0
        %267 = vmatpush2.msra.mxu0 0.0
        %268 = vmatprep.subr.mxu0 0.0
        %269 = vmatpush2.msra.mxu0 0.0
        %270 = vmatprep.subr.mxu0 0.0
        %271 = vmatpush2.msra.mxu0 0.0
        %272 = vmatprep.subr.mxu0 0.0
        %273 = vmatpush2.msra.mxu0 0.0
        %274 = vmatprep.subr.mxu0 0.0
        %275 = vmatpush2.msra.mxu0 0.0
        %276 = vmatprep.subr.mxu0 0.0
        %277 = vmatpush2.msra.mxu0 0.0
        %278 = vmatprep.subr.mxu0 0.0
        %279 = vmatpush2.msra.mxu0 0.0
        %280 = vmatprep.subr.mxu0 0.0
        %281 = vmatpush2.msra.mxu0 0.0
        %282 = vmatprep.subr.mxu0 0.0
        %283 = vmatpush2.msra.mxu0 0.0
        %284 = vmatprep.subr.mxu0 0.0
        %285 = vmatpush2.msra.mxu0 0.0
        %286 = vmatprep.subr.mxu0 0.0
        %287 = vmatpush2.msra.mxu0 0.0
        %288 = vmatprep.subr.mxu0 0.0
        %289 = vmatpush2.msra.mxu0 0.0
        %290 = vmatprep.mubr.f32.mxu0 0.0
        %291 = vmatmul.mubr.f32.gmra.mxu0 %v219
        %v292 = vpop.f32.mrf.mxu0
        %v293 = vadd.f32 %v213, %v292
        %v294 = vpop.f32.mrf.mxu0
        %v295 = vadd.f32 %v213, %v294
        %296 = vdwg.mxu0
        %v299 = vcombine.low %v293, %v295
        %301 = vst [vmem:[%s204] sm:$0xff] %v299
        %s302 = sand.u32 %s112, 1
        %s303 = scalar_lea.sflag [#allocation4], %s302
        %s304 = sand.u32 %s112, 1
        %s305 = smul.addr %s304, 8
        %s306 = scalar_lea.vmem [#allocation5], %s305
        // Predicated region
        $region37: #{tpu_custom_call.1} parent=31 // pred_check
          %p307 = pneg %p122
        $region38: #{tpu_custom_call.1} parent=31 // pred_check_branch
          %309 = sbr.rel (%p307) target = $region40
        $region39: #{tpu_custom_call.1} parent=31 // pred_region
          %s310 = smul.u32 2, %s25
          %s312 = ssub.s32 128, 128
          %313 = vsyncadd %s303, %s312
          %s314 = smul.addr %s24, 2
          %s315 = sadd.s32 %s310, %s314
          %s316 = smul.addr %s315, 64
          %s317 = scalar_lea.hbm %s3, %s316
          %s319 = sshll.u32 %s306, 4
          %s320 = int_to_ptr.vmem [resolvable:$true] %s319
          %322 = dma.vmem_to_hbm [thread:$0]  %s320, 128, %s317, %s303
        $region40: #{tpu_custom_call.1} parent=31 // pred_fallthru
          _
      $region32: #{tpu_custom_call.1} parent=5 // pred_fallthru
        _
      %p323 = scmp.le.s32.totalorder 2, %s15
      // Predicated region
      $region41: #{tpu_custom_call.1} parent=5 // pred_check
        %p324 = pneg %p323
      $region42: #{tpu_custom_call.1} parent=5 // pred_check_branch
        %326 = sbr.rel (%p324) target = $region44
      $region43: #{tpu_custom_call.1} parent=5 // pred_region
        %s327 = ssub.s32 %s15, 2
        // Predicated region
        $region45: #{tpu_custom_call.1} parent=43 // pred_check
          %p328 = pneg %p128
        $region46: #{tpu_custom_call.1} parent=43 // pred_check_branch
          %330 = sbr.rel (%p328) target = $region48
        $region47: #{tpu_custom_call.1} parent=43 // pred_region
          %s331 = sand.u32 %s113, 1
          %s332 = scalar_lea.sflag [#allocation4], %s331
          %s333 = sand.u32 %s113, 1
          %s334 = smul.addr %s333, 8
          %s335 = scalar_lea.vmem [#allocation5], %s334
          %336 = dma.done %s332, 128
        $region48: #{tpu_custom_call.1} parent=43 // pred_fallthru
          _
      $region44: #{tpu_custom_call.1} parent=5 // pred_fallthru
        _
    $region6: #{tpu_custom_call.1} parent=1 // loop_footer
      %s19 = sadd.s32 1, %s15
    $region7: #{tpu_custom_call.1} parent=1 // loop_footer_branch
      %14 = sbr.rel target = $region3
    $region8: #{tpu_custom_call.1} parent=1 // loop_exit
      _
    %337 = vsyncpa [#allocation3], 1
    %s338 = scalar_lea.sflag [#allocation3], 1
    %339 = vsyncpa %s338, 1
    %340 = vsyncpa [#allocation4], 1
    %s341 = scalar_lea.sflag [#allocation4], 1
    %342 = vsyncpa %s341, 1

</llo_original>
